<compile_context>
chip_gen: v6e
topology: v6e:2x2x1
jax: 0.10.0
libtpu: 0.0.40
codegen_flags: <defaults>
</compile_context>

<pallas_src>
import jax
import jax.numpy as jnp
from jax.experimental import pallas as pl
from jax.experimental.pallas import tpu as pltpu


def rope_kernel(xe_ref, xo_ref, cos_ref, sin_ref, out_ref):
    xe = xe_ref[...]                    # (TN, T, D/2)
    xo = xo_ref[...]                    # (TN, T, D/2)
    cos = cos_ref[...][None, :, :]      # (1, T, D/2) broadcast over batch tile
    sin = sin_ref[...][None, :, :]
    d2 = xe.shape[-1]
    # Concatenated-halves output, written with static lane-dense slices.
    out_ref[:, :, :d2] = (xe * cos - xo * sin).astype(out_ref.dtype)
    out_ref[:, :, d2:] = (xe * sin + xo * cos).astype(out_ref.dtype)


def rotary_positional_encoding(x, *, block_n=128):
    """x: (N, T, D) with D even. Returns rotary-encoded x, same shape/dtype."""
    n, t, d = x.shape
    assert d % 2 == 0, "dim must be even"
    d2 = d // 2

    # Tables (shape-only, like the registered inv_freq buffer + trig in forward).
    inv_freq = 1.0 / (10000.0 ** (jnp.arange(0, d, 2, dtype=jnp.float32) / d))
    freqs = jnp.arange(t, dtype=jnp.float32)[:, None] * inv_freq[None, :]  # (T, D/2)
    cos = jnp.cos(freqs).astype(x.dtype)
    sin = jnp.sin(freqs).astype(x.dtype)

    # Wrapper-side de-interleave (layout plumbing; all arithmetic is in-kernel).
    x_even = x[..., 0::2]
    x_odd = x[..., 1::2]

    tn = min(block_n, n)
    grid = (pl.cdiv(n, tn),)

    flops = 6 * n * t * d2  # 4 mul + 2 add per even/odd pair
    bytes_accessed = (2 * n * t * d2 + 2 * t * d2 + n * t * d) * x.dtype.itemsize

    return pl.pallas_call(
        rope_kernel,
        out_shape=jax.ShapeDtypeStruct((n, t, d), x.dtype),
        grid_spec=pltpu.PrefetchScalarGridSpec(
            num_scalar_prefetch=0,
            grid=grid,
            in_specs=[
                pl.BlockSpec((tn, t, d2), lambda i: (i, 0, 0)),   # x_even tile
                pl.BlockSpec((tn, t, d2), lambda i: (i, 0, 0)),   # x_odd tile
                pl.BlockSpec((t, d2), lambda i: (0, 0)),          # cos (resident)
                pl.BlockSpec((t, d2), lambda i: (0, 0)),          # sin (resident)
            ],
            out_specs=pl.BlockSpec((tn, t, d), lambda i: (i, 0, 0)),
        ),
        compiler_params=pltpu.CompilerParams(
            dimension_semantics=("parallel",),
        ),
        cost_estimate=pl.CostEstimate(
            flops=flops, transcendentals=0, bytes_accessed=bytes_accessed),
    )(x_even, x_odd, cos, sin)


def reference_forward(x):
    """Plain-JAX mirror of the PyTorch forward (correctness check)."""
    n, t, d = x.shape
    inv_freq = 1.0 / (10000.0 ** (jnp.arange(0, d, 2, dtype=jnp.float32) / d))
    freqs = jnp.arange(t, dtype=jnp.float32)[:, None] * inv_freq[None, :]
    sin, cos = jnp.sin(freqs)[None], jnp.cos(freqs)[None]
    x_even, x_odd = x[..., 0::2], x[..., 1::2]
    return jnp.concatenate(
        [x_even * cos - x_odd * sin, x_even * sin + x_odd * cos], axis=-1)


if __name__ == "__main__":
    # Module-natural shapes: batch=2, num_chunks=5, dim=1280 (module defaults).
    N, T, D = 2, 5, 1280
    x = jax.random.normal(jax.random.PRNGKey(0), (N, T, D), jnp.float32)

    out = jax.block_until_ready(rotary_positional_encoding(x))
    ref = jax.block_until_ready(reference_forward(x))

    assert out.shape == (N, T, D)
    assert jnp.allclose(out, ref, atol=1e-5, rtol=1e-5)
    print("KERNEL_OK")
</pallas_src>

<mosaic_0001>
module attributes {stable_mosaic.version = 11 : i64} {
  func.func @rope_kernel(%arg0: i32, %arg1: memref<2x5x640xf32, #tpu.memory_space<vmem>>, %arg2: memref<2x5x640xf32, #tpu.memory_space<vmem>>, %arg3: memref<5x640xf32, #tpu.memory_space<vmem>>, %arg4: memref<5x640xf32, #tpu.memory_space<vmem>>, %arg5: memref<2x5x1280xf32, #tpu.memory_space<vmem>>) attributes {dimension_semantics = [#tpu.dimension_semantics<parallel>], iteration_bounds = array<i64: 1>, scalar_prefetch = 0 : i64, scratch_operands = 0 : i64, tpu.core_type = #tpu.core_type<tc>, window_params = [{transform_indices = @transform_0, window_bounds = array<i64: 2, 5, 640>}, {transform_indices = @transform_1, window_bounds = array<i64: 2, 5, 640>}, {pipeline_mode = #tpu.pipeline_mode<synchronous>, transform_indices = @transform_2, window_bounds = array<i64: 5, 640>}, {pipeline_mode = #tpu.pipeline_mode<synchronous>, transform_indices = @transform_3, window_bounds = array<i64: 5, 640>}, {transform_indices = @transform_4, window_bounds = array<i64: 2, 5, 1280>}]} {
    %c0 = arith.constant 0 : index
    %c0_0 = arith.constant 0 : index
    %c0_1 = arith.constant 0 : index
    %0 = vector.load %arg1[%c0, %c0_0, %c0_1] : memref<2x5x640xf32, #tpu.memory_space<vmem>>, vector<2x5x640xf32>
    %c0_2 = arith.constant 0 : index
    %c0_3 = arith.constant 0 : index
    %c0_4 = arith.constant 0 : index
    %1 = vector.load %arg2[%c0_2, %c0_3, %c0_4] : memref<2x5x640xf32, #tpu.memory_space<vmem>>, vector<2x5x640xf32>
    %c0_5 = arith.constant 0 : index
    %c0_6 = arith.constant 0 : index
    %2 = vector.load %arg3[%c0_5, %c0_6] : memref<5x640xf32, #tpu.memory_space<vmem>>, vector<5x640xf32>
    %3 = vector.shape_cast %2 : vector<5x640xf32> to vector<1x5x640xf32>
    %c0_7 = arith.constant 0 : index
    %c0_8 = arith.constant 0 : index
    %4 = vector.load %arg4[%c0_7, %c0_8] : memref<5x640xf32, #tpu.memory_space<vmem>>, vector<5x640xf32>
    %5 = vector.shape_cast %4 : vector<5x640xf32> to vector<1x5x640xf32>
    %6 = vector.broadcast %3 : vector<1x5x640xf32> to vector<2x5x640xf32>
    %7 = arith.mulf %0, %6 : vector<2x5x640xf32>
    %8 = vector.broadcast %5 : vector<1x5x640xf32> to vector<2x5x640xf32>
    %9 = arith.mulf %1, %8 : vector<2x5x640xf32>
    %10 = arith.subf %7, %9 : vector<2x5x640xf32>
    %c0_9 = arith.constant 0 : index
    %c0_10 = arith.constant 0 : index
    %c0_11 = arith.constant 0 : index
    %11 = vector.load %arg5[%c0_9, %c0_10, %c0_11] : memref<2x5x1280xf32, #tpu.memory_space<vmem>>, vector<2x5x640xf32>
    tpu.vector_store %arg5[%c0_9, %c0_10, %c0_11], %10 {strides = array<i32>} : memref<2x5x1280xf32, #tpu.memory_space<vmem>>, vector<2x5x640xf32>,
    %12 = vector.broadcast %5 : vector<1x5x640xf32> to vector<2x5x640xf32>
    %13 = arith.mulf %0, %12 : vector<2x5x640xf32>
    %14 = vector.broadcast %3 : vector<1x5x640xf32> to vector<2x5x640xf32>
    %15 = arith.mulf %1, %14 : vector<2x5x640xf32>
    %16 = arith.addf %13, %15 : vector<2x5x640xf32>
    %c0_12 = arith.constant 0 : index
    %c0_13 = arith.constant 0 : index
    %c640 = arith.constant 640 : index
    %17 = vector.load %arg5[%c0_12, %c0_13, %c640] : memref<2x5x1280xf32, #tpu.memory_space<vmem>>, vector<2x5x640xf32>
    tpu.vector_store %arg5[%c0_12, %c0_13, %c640], %16 {strides = array<i32>} : memref<2x5x1280xf32, #tpu.memory_space<vmem>>, vector<2x5x640xf32>,
    return
  }
  func.func @transform_0(%arg0: i32) -> (i32, i32, i32) {
    %c0_i32 = arith.constant 0 : i32
    %c0_i32_0 = arith.constant 0 : i32
    %c0_i32_1 = arith.constant 0 : i32
    return %arg0, %c0_i32, %c0_i32_0 : i32, i32, i32
  }
  func.func @transform_1(%arg0: i32) -> (i32, i32, i32) {
    %c0_i32 = arith.constant 0 : i32
    %c0_i32_0 = arith.constant 0 : i32
    %c0_i32_1 = arith.constant 0 : i32
    return %arg0, %c0_i32, %c0_i32_0 : i32, i32, i32
  }
  func.func @transform_2(%arg0: i32) -> (i32, i32) {
    %c0_i32 = arith.constant 0 : i32
    %c0_i32_0 = arith.constant 0 : i32
    %c0_i32_1 = arith.constant 0 : i32
    return %c0_i32, %c0_i32_0 : i32, i32
  }
  func.func @transform_3(%arg0: i32) -> (i32, i32) {
    %c0_i32 = arith.constant 0 : i32
    %c0_i32_0 = arith.constant 0 : i32
    %c0_i32_1 = arith.constant 0 : i32
    return %c0_i32, %c0_i32_0 : i32, i32
  }
  func.func @transform_4(%arg0: i32) -> (i32, i32, i32) {
    %c0_i32 = arith.constant 0 : i32
    %c0_i32_0 = arith.constant 0 : i32
    %c0_i32_1 = arith.constant 0 : i32
    return %arg0, %c0_i32, %c0_i32_0 : i32, i32, i32
  }
}

</mosaic_0001>

<llo_original>
// kernel: tpu_custom_call.1
$region0: #{tpu_custom_call.1}
  #allocation0 [shape = 'u32[]', space=smem, size = 0x4, offset = 0x4, fixed_abs, tag = 'smem constant byte address 0x4 - core index']
  #allocation1 [shape = 'u32[144,128]{1,0:T(1,128)}', space=vmem, size = 0x12000, scoped, tag = 'internal scratch']
  %s0 = inlined_call_operand.vmem [shape: f32[2,5,640], index: 0, kind: input, shape index: {}]
  %s1 = inlined_call_operand.vmem [shape: f32[2,5,640], index: 1, kind: input, shape index: {}]
  %s2 = inlined_call_operand.vmem [shape: f32[5,640], index: 2, kind: input, shape index: {}]
  %s3 = inlined_call_operand.vmem [shape: f32[5,640], index: 3, kind: input, shape index: {}]
  %s4 = inlined_call_operand.vmem [shape: f32[2,5,1280], index: 4, kind: output, shape index: {}]
  %s5 = sld [smem:[#allocation0]]
  $region26: #{tpu_custom_call.1} parent=0
    _
  %s7 = ssub.s32 1, %s5
  %s8 = scalar_select 0, %s7, %s5
  // Predicated region
  $region2: #{tpu_custom_call.1} parent=0 // pred_check
    _
  $region3: #{tpu_custom_call.1} parent=0 // pred_check_branch
    %10 = sbr.rel (0) target = $region5
  $region4: #{tpu_custom_call.1} parent=0 // pred_region
    _
  $region5: #{tpu_custom_call.1} parent=0 // pred_fallthru
    _
  // Predicated region
  $region6: #{tpu_custom_call.1} parent=0 // pred_check
    _
  $region7: #{tpu_custom_call.1} parent=0 // pred_check_branch
    %12 = sbr.rel (0) target = $region9
  $region8: #{tpu_custom_call.1} parent=0 // pred_region
    _
  $region9: #{tpu_custom_call.1} parent=0 // pred_fallthru
    _
  // Predicated region
  $region10: #{tpu_custom_call.1} parent=0 // pred_check
    _
  $region11: #{tpu_custom_call.1} parent=0 // pred_check_branch
    %14 = sbr.rel (0) target = $region13
  $region12: #{tpu_custom_call.1} parent=0 // pred_region
    _
  $region13: #{tpu_custom_call.1} parent=0 // pred_fallthru
    _
  // Predicated region
  $region14: #{tpu_custom_call.1} parent=0 // pred_check
    _
  $region15: #{tpu_custom_call.1} parent=0 // pred_check_branch
    %16 = sbr.rel (0) target = $region17
  $region16: #{tpu_custom_call.1} parent=0 // pred_region
    _
  $region17: #{tpu_custom_call.1} parent=0 // pred_fallthru
    _
  %v17 = vld [vmem:[%s0] sm:$0x1f]
  %v18 = vld [vmem:[%s0 + $0x8] sm:$0x1f]
  %v19 = vld [vmem:[%s0 + $0x10] sm:$0x1f]
  %v20 = vld [vmem:[%s0 + $0x18] sm:$0x1f]
  %v21 = vld [vmem:[%s0 + $0x20] sm:$0x1f]
  %v22 = vld [vmem:[%s0 + $0x28] sm:$0x1f]
  %v23 = vld [vmem:[%s0 + $0x30] sm:$0x1f]
  %v24 = vld [vmem:[%s0 + $0x38] sm:$0x1f]
  %v25 = vld [vmem:[%s0 + $0x40] sm:$0x1f]
  %v26 = vld [vmem:[%s0 + $0x48] sm:$0x1f]
  %v27 = vld [vmem:[%s1] sm:$0x1f]
  %v28 = vld [vmem:[%s1 + $0x8] sm:$0x1f]
  %v29 = vld [vmem:[%s1 + $0x10] sm:$0x1f]
  %v30 = vld [vmem:[%s1 + $0x18] sm:$0x1f]
  %v31 = vld [vmem:[%s1 + $0x20] sm:$0x1f]
  %v32 = vld [vmem:[%s1 + $0x28] sm:$0x1f]
  %v33 = vld [vmem:[%s1 + $0x30] sm:$0x1f]
  %v34 = vld [vmem:[%s1 + $0x38] sm:$0x1f]
  %v35 = vld [vmem:[%s1 + $0x40] sm:$0x1f]
  %v36 = vld [vmem:[%s1 + $0x48] sm:$0x1f]
  %v37 = vld [vmem:[%s2] sm:$0x1f]
  %v38 = vld [vmem:[%s2 + $0x8] sm:$0x1f]
  %v39 = vld [vmem:[%s2 + $0x10] sm:$0x1f]
  %v40 = vld [vmem:[%s2 + $0x18] sm:$0x1f]
  %v41 = vld [vmem:[%s2 + $0x20] sm:$0x1f]
  %v42 = vld [vmem:[%s3] sm:$0x1f]
  %v43 = vld [vmem:[%s3 + $0x8] sm:$0x1f]
  %v44 = vld [vmem:[%s3 + $0x10] sm:$0x1f]
  %v45 = vld [vmem:[%s3 + $0x18] sm:$0x1f]
  %v46 = vld [vmem:[%s3 + $0x20] sm:$0x1f]
  %v47 = vmul.f32 %v17, %v37
  %v48 = vmul.f32 %v18, %v38
  %v49 = vmul.f32 %v19, %v39
  %v50 = vmul.f32 %v20, %v40
  %v51 = vmul.f32 %v21, %v41
  %v52 = vmul.f32 %v22, %v37
  %v53 = vmul.f32 %v23, %v38
  %v54 = vmul.f32 %v24, %v39
  %v55 = vmul.f32 %v25, %v40
  %v56 = vmul.f32 %v26, %v41
  %v57 = vmul.f32 %v27, %v42
  %v58 = vmul.f32 %v28, %v43
  %v59 = vmul.f32 %v29, %v44
  %v60 = vmul.f32 %v30, %v45
  %v61 = vmul.f32 %v31, %v46
  %v62 = vmul.f32 %v32, %v42
  %v63 = vmul.f32 %v33, %v43
  %v64 = vmul.f32 %v34, %v44
  %v65 = vmul.f32 %v35, %v45
  %v66 = vmul.f32 %v36, %v46
  %v67 = vsub.f32 %v47, %v57
  %v68 = vsub.f32 %v48, %v58
  %v69 = vsub.f32 %v49, %v59
  %v70 = vsub.f32 %v50, %v60
  %v71 = vsub.f32 %v51, %v61
  %v72 = vsub.f32 %v52, %v62
  %v73 = vsub.f32 %v53, %v63
  %v74 = vsub.f32 %v54, %v64
  %v75 = vsub.f32 %v55, %v65
  %v76 = vsub.f32 %v56, %v66
  %77 = vst [vmem:[%s4] sm:$0x1f] %v67
  %78 = vst [vmem:[%s4 + $0x8] sm:$0x1f] %v68
  %79 = vst [vmem:[%s4 + $0x10] sm:$0x1f] %v69
  %80 = vst [vmem:[%s4 + $0x18] sm:$0x1f] %v70
  %81 = vst [vmem:[%s4 + $0x20] sm:$0x1f] %v71
  %82 = vst [vmem:[%s4 + $0x50] sm:$0x1f] %v72
  %83 = vst [vmem:[%s4 + $0x58] sm:$0x1f] %v73
  %84 = vst [vmem:[%s4 + $0x60] sm:$0x1f] %v74
  %85 = vst [vmem:[%s4 + $0x68] sm:$0x1f] %v75
  %86 = vst [vmem:[%s4 + $0x70] sm:$0x1f] %v76
  %v87 = vmul.f32 %v17, %v42
  %v88 = vmul.f32 %v18, %v43
  %v89 = vmul.f32 %v19, %v44
  %v90 = vmul.f32 %v20, %v45
  %v91 = vmul.f32 %v21, %v46
  %v92 = vmul.f32 %v22, %v42
  %v93 = vmul.f32 %v23, %v43
  %v94 = vmul.f32 %v24, %v44
  %v95 = vmul.f32 %v25, %v45
  %v96 = vmul.f32 %v26, %v46
  %v97 = vmul.f32 %v27, %v37
  %v98 = vmul.f32 %v28, %v38
  %v99 = vmul.f32 %v29, %v39
  %v100 = vmul.f32 %v30, %v40
  %v101 = vmul.f32 %v31, %v41
  %v102 = vmul.f32 %v32, %v37
  %v103 = vmul.f32 %v33, %v38
  %v104 = vmul.f32 %v34, %v39
  %v105 = vmul.f32 %v35, %v40
  %v106 = vmul.f32 %v36, %v41
  %v107 = vadd.f32 %v87, %v97
  %v108 = vadd.f32 %v88, %v98
  %v109 = vadd.f32 %v89, %v99
  %v110 = vadd.f32 %v90, %v100
  %v111 = vadd.f32 %v91, %v101
  %v112 = vadd.f32 %v92, %v102
  %v113 = vadd.f32 %v93, %v103
  %v114 = vadd.f32 %v94, %v104
  %v115 = vadd.f32 %v95, %v105
  %v116 = vadd.f32 %v96, %v106
  %117 = vst [vmem:[%s4 + $0x28] sm:$0x1f] %v107
  %118 = vst [vmem:[%s4 + $0x30] sm:$0x1f] %v108
  %119 = vst [vmem:[%s4 + $0x38] sm:$0x1f] %v109
  %120 = vst [vmem:[%s4 + $0x40] sm:$0x1f] %v110
  %121 = vst [vmem:[%s4 + $0x48] sm:$0x1f] %v111
  %122 = vst [vmem:[%s4 + $0x78] sm:$0x1f] %v112
  %123 = vst [vmem:[%s4 + $0x80] sm:$0x1f] %v113
  %124 = vst [vmem:[%s4 + $0x88] sm:$0x1f] %v114
  %125 = vst [vmem:[%s4 + $0x90] sm:$0x1f] %v115
  %126 = vst [vmem:[%s4 + $0x98] sm:$0x1f] %v116
  // Predicated region
  $region18: #{tpu_custom_call.1} parent=0 // pred_check
    _
  $region19: #{tpu_custom_call.1} parent=0 // pred_check_branch
    %128 = sbr.rel (0) target = $region21
  $region20: #{tpu_custom_call.1} parent=0 // pred_region
    _
  $region21: #{tpu_custom_call.1} parent=0 // pred_fallthru
    _
  // Predicated region
  $region22: #{tpu_custom_call.1} parent=0 // pred_check
    _
  $region23: #{tpu_custom_call.1} parent=0 // pred_check_branch
    %130 = sbr.rel (0) target = $region25
  $region24: #{tpu_custom_call.1} parent=0 // pred_region
    _
  $region25: #{tpu_custom_call.1} parent=0 // pred_fallthru
    _

</llo_original>
